<compile_context>
chip_gen: v6e
topology: v6e:2x2x1
jax: 0.10.0
libtpu: 0.0.40
codegen_flags: <defaults>
</compile_context>

<pallas_src>
import functools
import math

import jax
import jax.numpy as jnp
from jax.experimental import pallas as pl
from jax.experimental.pallas import tpu as pltpu

_VMEM_LIMIT = 32 * 1024 * 1024  # safe on v5e/v6e (128 MiB phys) and v7x (64 MiB phys)


def _round_up(x, m):
    return ((x + m - 1) // m) * m


def _k_tile(fin_pad, cap=512):
    """Largest 128-multiple divisor of fin_pad that is <= cap."""
    if fin_pad <= cap:
        return fin_pad
    m = fin_pad // 128
    best = 1
    for d in range(1, cap // 128 + 1):
        if m % d == 0:
            best = d
    return 128 * best


def _pad2(a, rows, cols, dtype):
    a = a.astype(dtype)
    return jnp.pad(a, ((0, rows - a.shape[0]), (0, cols - a.shape[1])))


# ----------------------------------------------------------------------------
# Kernels
# ----------------------------------------------------------------------------
def transform_kernel(x_ref, w_ref, p_ref, out2_ref, acc_ref, *, gamma, fout, second):
    """Row- and K-tiled GGCL feature transform (single fused MXU matmul).

    h = x @ [Wm | Ws]   (layer 2 uses a block-diagonal W so the concatenated
                         [miu1_out | sig1_out] input feeds both branches)
      miu   = elu(h[:, :fout]),   sigma = relu(h[:, fout:])
      p     = miu * exp(-gamma*sigma)                       (always emitted)
      out2  = sigma * att * att       if second == "q"      (layer 1)
            = sigma                   if second == "sigma"  (layer 2)
    # TODO(synk): dropout omitted (eval-mode / deterministic forward).
    """
    k = pl.program_id(1)

    @pl.when(k == 0)
    def _():
        acc_ref[...] = jnp.zeros_like(acc_ref)

    acc_ref[...] += jnp.dot(x_ref[...], w_ref[...],
                            preferred_element_type=jnp.float32)

    @pl.when(k == pl.num_programs(1) - 1)
    def _():
        h = acc_ref[...]
        h_m = h[:, :fout]
        h_s = h[:, fout:]
        # ELU with overflow-safe exp (exp only sees non-positive inputs).
        miu = jnp.where(h_m > 0, h_m, jnp.exp(jnp.minimum(h_m, 0.0)) - 1.0)
        sigma = jnp.maximum(h_s, 0.0)                        # ReLU
        att = jnp.exp(-gamma * sigma)                        # single EUP exp
        p_ref[...] = (miu * att).astype(p_ref.dtype)
        if second == "q":
            out2_ref[...] = (sigma * att * att).astype(out2_ref.dtype)  # VPU
        else:
            out2_ref[...] = sigma.astype(out2_ref.dtype)


def agg_dual_kernel(a1_ref, a2_ref, p_ref, q_ref, out_ref, *, h_pad):
    """Layer-1 aggregation: out = [A1 @ P | A2 @ Q], k-tiled.

    The output block index is invariant across k, so out_ref is VMEM-resident
    and used directly as the f32 accumulator (no scratch, no finalize copy)."""
    k = pl.program_id(1)

    @pl.when(k == 0)
    def _():
        out_ref[...] = jnp.zeros_like(out_ref)

    out_ref[:, pl.ds(0, h_pad)] += jnp.dot(
        a1_ref[...], p_ref[...], preferred_element_type=jnp.float32)
    out_ref[:, pl.ds(h_pad, h_pad)] += jnp.dot(
        a2_ref[...], q_ref[...], preferred_element_type=jnp.float32)


def agg_head_kernel(a1_ref, p_ref, sig_ref, eps_ref, out_ref, *, nclass):
    """Layer-2 aggregation (A1 @ P2) fused with the RGCN output head:
    out = log_softmax(A1@P2 + eps*sqrt(sigma2_pre + 1e-8)) over valid classes."""
    k = pl.program_id(1)

    @pl.when(k == 0)
    def _():
        out_ref[...] = jnp.zeros_like(out_ref)

    out_ref[...] += jnp.dot(a1_ref[...], p_ref[...],
                            preferred_element_type=jnp.float32)

    @pl.when(k == pl.num_programs(1) - 1)
    def _():
        x = out_ref[...] + eps_ref[...] * jnp.sqrt(sig_ref[...] + 1e-8)
        col = jax.lax.broadcasted_iota(jnp.int32, x.shape, 1)
        xv = jnp.where(col < nclass, x, -1e30)   # ignore padded class columns
        m = jnp.max(xv, axis=1, keepdims=True)
        lse = m + jnp.log(jnp.sum(jnp.exp(xv - m), axis=1, keepdims=True))
        out_ref[...] = x - lse


# ----------------------------------------------------------------------------
# pallas_call wrappers
# ----------------------------------------------------------------------------
def ggcl_transform(x, w, fout_pad, gamma, second, tile_rows,
                   p_dtype, s_dtype, k_cap=512):
    n_pad, fin_pad = x.shape
    tk = _k_tile(fin_pad, k_cap)
    kernel = functools.partial(transform_kernel, gamma=gamma, fout=fout_pad,
                               second=second)
    return pl.pallas_call(
        kernel,
        out_shape=(jax.ShapeDtypeStruct((n_pad, fout_pad), p_dtype),
                   jax.ShapeDtypeStruct((n_pad, fout_pad), s_dtype)),
        grid=(n_pad // tile_rows, fin_pad // tk),
        in_specs=[pl.BlockSpec((tile_rows, tk), lambda i, k: (i, k)),
                  pl.BlockSpec((tk, w.shape[1]), lambda i, k: (k, 0))],
        out_specs=(pl.BlockSpec((tile_rows, fout_pad), lambda i, k: (i, 0)),
                   pl.BlockSpec((tile_rows, fout_pad), lambda i, k: (i, 0))),
        scratch_shapes=[pltpu.VMEM((tile_rows, 2 * fout_pad), jnp.float32)],
        compiler_params=pltpu.CompilerParams(
            dimension_semantics=("parallel", "arbitrary"),
            vmem_limit_bytes=_VMEM_LIMIT),
    )(x, w)


def ggcl_aggregate_dual(a1, a2, p, q, h_pad, tile):
    n_pad = a1.shape[0]
    kernel = functools.partial(agg_dual_kernel, h_pad=h_pad)
    return pl.pallas_call(
        kernel,
        out_shape=jax.ShapeDtypeStruct((n_pad, 2 * h_pad), jnp.float32),
        grid=(n_pad // tile, n_pad // tile),
        in_specs=[pl.BlockSpec((tile, tile), lambda i, k: (i, k)),
                  pl.BlockSpec((tile, tile), lambda i, k: (i, k)),
                  pl.BlockSpec((tile, h_pad), lambda i, k: (k, 0)),
                  pl.BlockSpec((tile, h_pad), lambda i, k: (k, 0))],
        out_specs=pl.BlockSpec((tile, 2 * h_pad), lambda i, k: (i, 0)),
        compiler_params=pltpu.CompilerParams(
            dimension_semantics=("parallel", "arbitrary"),
            vmem_limit_bytes=_VMEM_LIMIT),
    )(a1, a2, p, q)


def ggcl_aggregate_head(a1, p, sig_pre, eps, nclass, c_pad, tile):
    n_pad = a1.shape[0]
    kernel = functools.partial(agg_head_kernel, nclass=nclass)
    return pl.pallas_call(
        kernel,
        out_shape=jax.ShapeDtypeStruct((n_pad, c_pad), jnp.float32),
        grid=(n_pad // tile, n_pad // tile),
        in_specs=[pl.BlockSpec((tile, tile), lambda i, k: (i, k)),
                  pl.BlockSpec((tile, c_pad), lambda i, k: (k, 0)),
                  pl.BlockSpec((tile, c_pad), lambda i, k: (i, 0)),
                  pl.BlockSpec((tile, c_pad), lambda i, k: (i, 0))],
        out_specs=pl.BlockSpec((tile, c_pad), lambda i, k: (i, 0)),
        compiler_params=pltpu.CompilerParams(
            dimension_semantics=("parallel", "arbitrary"),
            vmem_limit_bytes=_VMEM_LIMIT),
    )(a1, p, sig_pre, eps)


# ----------------------------------------------------------------------------
# Graph preparation (static across forward calls) + full forward
# ----------------------------------------------------------------------------
def prepare_graph(features, adj_norm1, adj_norm2, *, tile=512,
                  agg_dtype=jnp.bfloat16, feat_k_cap=512):
    """Pad + cast the static graph tensors ONCE (hoisted out of the forward).

    The two N x N adjacency matrices dominate HBM traffic; they are cast to
    `agg_dtype` (bf16 by default) and zero-padded to the aggregation tile."""
    n, f = features.shape
    t = min(tile, _round_up(n, 128))
    n_pad = _round_up(n, t)
    f_pad = _round_up(f, 128)
    return {
        "x": _pad2(features, n_pad, f_pad, jnp.float32),
        "a1": _pad2(adj_norm1, n_pad, n_pad, agg_dtype),
        "a2": _pad2(adj_norm2, n_pad, n_pad, agg_dtype),
        "n": n, "f": f, "f_pad": f_pad, "n_pad": n_pad, "tile": t,
        "agg_dtype": agg_dtype, "feat_k_cap": feat_k_cap,
    }


def rgcn_forward(graph, params, eps, gamma=1.0):
    """Full RGCN forward (num_layers=2); hot path inside the Pallas kernels."""
    n, f = graph["n"], graph["f"]
    n_pad, f_pad, t = graph["n_pad"], graph["f_pad"], graph["tile"]
    agg_dtype = graph["agg_dtype"]

    nhid = params["gc1_wm"].shape[1]
    nclass = params["gc2_wm"].shape[1]
    h_pad = _round_up(nhid, 128)
    c_pad = _round_up(nclass, 128)

    eps_p = _pad2(eps, n_pad, c_pad, jnp.float32)

    # layer-1 fused weight: [Wm1 | Ws1], zero-padded to 128-lane multiples.
    w1 = jnp.zeros((f_pad, 2 * h_pad), jnp.float32)
    w1 = w1.at[:f, :nhid].set(params["gc1_wm"].astype(jnp.float32))
    w1 = w1.at[:f, h_pad:h_pad + nhid].set(params["gc1_ws"].astype(jnp.float32))

    # layer-2 block-diagonal weight so [miu1_out | sig1_out] @ W2 = [h_m | h_s].
    w2 = jnp.zeros((2 * h_pad, 2 * c_pad), jnp.float32)
    w2 = w2.at[:nhid, :nclass].set(params["gc2_wm"].astype(jnp.float32))
    w2 = w2.at[h_pad:h_pad + nhid, c_pad:c_pad + nclass].set(
        params["gc2_ws"].astype(jnp.float32))

    # ---- layer 1 (GGCL_F): P/Q emitted directly in the aggregation dtype ----
    p1, q1 = ggcl_transform(graph["x"], w1, h_pad, gamma, "q", t,
                            p_dtype=agg_dtype, s_dtype=agg_dtype,
                            k_cap=graph["feat_k_cap"])
    x2 = ggcl_aggregate_dual(graph["a1"], graph["a2"], p1, q1, h_pad, t)

    # ---- layer 2 (GGCL_D) + fused output head ----
    # sigma2_pre stays f32 (feeds eps*sqrt in the head); P2 streams in bf16.
    p2, sig2_pre = ggcl_transform(x2, w2, c_pad, gamma, "sigma", t,
                                  p_dtype=agg_dtype, s_dtype=jnp.float32,
                                  k_cap=graph["feat_k_cap"])
    out = ggcl_aggregate_head(graph["a1"], p2, sig2_pre, eps_p, nclass, c_pad, t)

    return out[:n, :nclass]


# ----------------------------------------------------------------------------
# Parameter / input construction + pure-JAX reference (plain-JAX glue)
# ----------------------------------------------------------------------------
def xavier_uniform(key, fan_in, fan_out):
    limit = math.sqrt(6.0 / (fan_in + fan_out))
    return jax.random.uniform(key, (fan_in, fan_out), jnp.float32, -limit, limit)


def normalize_adj(adj, power):
    """Dense version of RGCN._normalize_adj: D^p (A+I) D^p."""
    n = adj.shape[0]
    A = adj + jnp.eye(n, dtype=adj.dtype)
    d = jnp.power(A.sum(axis=1), power)
    d = jnp.where(jnp.isinf(d), 0.0, d)
    D = jnp.diag(d)
    return D @ A @ D


def reference_forward(features, adj1, adj2, params, eps, gamma=1.0):
    """Pure-JAX reference for the sanity check."""
    elu = lambda v: jnp.where(v > 0, v, jnp.exp(jnp.minimum(v, 0.0)) - 1.0)

    def layer(xm, xs, wm, ws):
        miu = elu(xm @ wm)
        sigma = jnp.maximum(xs @ ws, 0.0)
        att = jnp.exp(-gamma * sigma)
        return adj1 @ (miu * att), adj2 @ (sigma * att * att), sigma

    m1, s1, _ = layer(features, features, params["gc1_wm"], params["gc1_ws"])
    m2, _, s2p = layer(m1, s1, params["gc2_wm"], params["gc2_ws"])
    out = m2 + eps * jnp.sqrt(s2p + 1e-8)
    return jax.nn.log_softmax(out, axis=1)


if __name__ == "__main__":
    # Small shapes consistent with RGCN(nnodes, nfeat, nhid, nclass)
    nnodes, nfeat, nhid, nclass = 16, 32, 32, 8
    gamma = 1.0

    key = jax.random.PRNGKey(0)
    k_feat, k_adj, k_w1m, k_w1s, k_w2m, k_w2s, k_eps = jax.random.split(key, 7)

    # node features
    features = jax.random.normal(k_feat, (nnodes, nfeat), jnp.float32)

    # random symmetric binary adjacency (no self loops; _normalize_adj adds I)
    upper = (jax.random.uniform(k_adj, (nnodes, nnodes)) < 0.3).astype(jnp.float32)
    adj = jnp.triu(upper, k=1)
    adj = adj + adj.T

    adj_norm1 = normalize_adj(adj, power=-0.5)
    adj_norm2 = normalize_adj(adj, power=-1.0)

    params = {
        "gc1_wm": xavier_uniform(k_w1m, nfeat, nhid),
        "gc1_ws": xavier_uniform(k_w1s, nfeat, nhid),
        "gc2_wm": xavier_uniform(k_w2m, nhid, nclass),
        "gc2_ws": xavier_uniform(k_w2s, nhid, nclass),
    }

    # self.gaussian.sample(): standard normal (identity covariance) of (N, nclass)
    eps = jax.random.normal(k_eps, (nnodes, nclass), jnp.float32)

    ref = reference_forward(features, adj_norm1, adj_norm2, params, eps, gamma)

    # f32 streaming path (faithful to the reference) -- tight check
    graph_f32 = prepare_graph(features, adj_norm1, adj_norm2,
                              agg_dtype=jnp.float32)
    out_f32 = jax.block_until_ready(rgcn_forward(graph_f32, params, eps, gamma))
    assert out_f32.shape == (nnodes, nclass)
    assert jnp.allclose(out_f32, ref, atol=1e-3, rtol=1e-3), "f32 mismatch vs reference"

    # default bf16 streaming path (halves the dominant HBM traffic) -- loose check
    graph = prepare_graph(features, adj_norm1, adj_norm2)   # agg_dtype=bf16 default
    out = jax.block_until_ready(rgcn_forward(graph, params, eps, gamma))
    assert out.shape == (nnodes, nclass)
    assert jnp.allclose(out, ref, atol=2e-1), "bf16 mismatch vs reference"

    print("KERNEL_OK")
</pallas_src>

<mosaic_0001>
module attributes {stable_mosaic.version = 11 : i64} {
  func.func @transform_kernel(%arg0: i32, %arg1: i32, %arg2: memref<128x128xf32, #tpu.memory_space<vmem>>, %arg3: memref<128x256xf32, #tpu.memory_space<vmem>>, %arg4: memref<128x128xf32, #tpu.memory_space<vmem>>, %arg5: memref<128x128xf32, #tpu.memory_space<vmem>>, %arg6: memref<128x256xf32, #tpu.memory_space<vmem>>) attributes {dimension_semantics = [#tpu.dimension_semantics<parallel>, #tpu.dimension_semantics<arbitrary>], iteration_bounds = array<i64: 1, 1>, scalar_prefetch = 0 : i64, scratch_operands = 1 : i64, tpu.core_type = #tpu.core_type<tc>, window_params = [{transform_indices = @transform_0, window_bounds = array<i64: 128, 128>}, {transform_indices = @transform_1, window_bounds = array<i64: 128, 256>}, {transform_indices = @transform_2, window_bounds = array<i64: 128, 128>}, {transform_indices = @transform_3, window_bounds = array<i64: 128, 128>}]} {
    %c0_i32 = arith.constant 0 : i32
    %0 = arith.cmpi eq, %arg1, %c0_i32 : i32
    %1 = arith.extui %0 : i1 to i32
    %c0_i32_0 = arith.constant 0 : i32
    %2 = arith.cmpi ne, %1, %c0_i32_0 : i32
    scf.if %2 {
      %cst_10 = arith.constant 0.000000e+00 : f32
      %12 = vector.broadcast %cst_10 : f32 to vector<128x256xf32>
      %c0_11 = arith.constant 0 : index
      %c0_12 = arith.constant 0 : index
      %13 = vector.load %arg6[%c0_11, %c0_12] : memref<128x256xf32, #tpu.memory_space<vmem>>, vector<128x256xf32>
      tpu.vector_store %arg6[%c0_11, %c0_12], %12 {strides = array<i32>} : memref<128x256xf32, #tpu.memory_space<vmem>>, vector<128x256xf32>,
    } else {
    }
    %c0 = arith.constant 0 : index
    %c0_1 = arith.constant 0 : index
    %3 = vector.load %arg6[%c0, %c0_1] : memref<128x256xf32, #tpu.memory_space<vmem>>, vector<128x256xf32>
    %c0_2 = arith.constant 0 : index
    %c0_3 = arith.constant 0 : index
    %4 = vector.load %arg2[%c0_2, %c0_3] : memref<128x128xf32, #tpu.memory_space<vmem>>, vector<128x128xf32>
    %c0_4 = arith.constant 0 : index
    %c0_5 = arith.constant 0 : index
    %5 = vector.load %arg3[%c0_4, %c0_5] : memref<128x256xf32, #tpu.memory_space<vmem>>, vector<128x256xf32>
    %cst = arith.constant dense<0.000000e+00> : vector<128x256xf32>
    %6 = tpu.matmul %4, %5, %cst {dimension_numbers = #tpu.dot_dimension_numbers<[1], [0], [0], [1], [0, 0, 1, 1], [], []>} : vector<128x128xf32>, vector<128x256xf32>, vector<128x256xf32> -> vector<128x256xf32>
    %7 = arith.addf %3, %6 : vector<128x256xf32>
    %c0_6 = arith.constant 0 : index
    %c0_7 = arith.constant 0 : index
    %8 = vector.load %arg6[%c0_6, %c0_7] : memref<128x256xf32, #tpu.memory_space<vmem>>, vector<128x256xf32>
    tpu.vector_store %arg6[%c0_6, %c0_7], %7 {strides = array<i32>} : memref<128x256xf32, #tpu.memory_space<vmem>>, vector<128x256xf32>,
    %c0_i32_8 = arith.constant 0 : i32
    %9 = arith.cmpi eq, %arg1, %c0_i32_8 : i32
    %10 = arith.extui %9 : i1 to i32
    %c0_i32_9 = arith.constant 0 : i32
    %11 = arith.cmpi ne, %10, %c0_i32_9 : i32
    scf.if %11 {
      %c0_10 = arith.constant 0 : index
      %c0_11 = arith.constant 0 : index
      %12 = vector.load %arg6[%c0_10, %c0_11] : memref<128x256xf32, #tpu.memory_space<vmem>>, vector<128x256xf32>
      %13 = vector.extract_strided_slice %12 {offsets = [0, 0], sizes = [128, 128], strides = [1, 1]} : vector<128x256xf32> to vector<128x128xf32>
      %14 = vector.extract_strided_slice %12 {offsets = [0, 128], sizes = [128, 128], strides = [1, 1]} : vector<128x256xf32> to vector<128x128xf32>
      %cst_12 = arith.constant 0.000000e+00 : f32
      %15 = vector.broadcast %cst_12 : f32 to vector<128x128xf32>
      %16 = arith.cmpf ogt, %13, %15 : vector<128x128xf32>
      %cst_13 = arith.constant 0.000000e+00 : f32
      %17 = vector.broadcast %cst_13 : f32 to vector<128x128xf32>
      %18 = arith.minimumf %13, %17 : vector<128x128xf32>
      %19 = math.exp %18 : vector<128x128xf32>
      %cst_14 = arith.constant 1.000000e+00 : f32
      %20 = vector.broadcast %cst_14 : f32 to vector<128x128xf32>
      %21 = arith.subf %19, %20 : vector<128x128xf32>
      %22 = arith.select %16, %13, %21 : vector<128x128xi1>, vector<128x128xf32>
      %cst_15 = arith.constant 0.000000e+00 : f32
      %23 = vector.broadcast %cst_15 : f32 to vector<128x128xf32>
      %24 = arith.maximumf %14, %23 : vector<128x128xf32>
      %cst_16 = arith.constant -1.000000e+00 : f32
      %25 = vector.broadcast %cst_16 : f32 to vector<128x128xf32>
      %26 = arith.mulf %25, %24 : vector<128x128xf32>
      %27 = math.exp %26 : vector<128x128xf32>
      %28 = arith.mulf %22, %27 : vector<128x128xf32>
      %c0_17 = arith.constant 0 : index
      %c0_18 = arith.constant 0 : index
      %29 = vector.load %arg4[%c0_17, %c0_18] : memref<128x128xf32, #tpu.memory_space<vmem>>, vector<128x128xf32>
      tpu.vector_store %arg4[%c0_17, %c0_18], %28 {strides = array<i32>} : memref<128x128xf32, #tpu.memory_space<vmem>>, vector<128x128xf32>,
      %30 = arith.mulf %24, %27 : vector<128x128xf32>
      %31 = arith.mulf %30, %27 : vector<128x128xf32>
      %c0_19 = arith.constant 0 : index
      %c0_20 = arith.constant 0 : index
      %32 = vector.load %arg5[%c0_19, %c0_20] : memref<128x128xf32, #tpu.memory_space<vmem>>, vector<128x128xf32>
      tpu.vector_store %arg5[%c0_19, %c0_20], %31 {strides = array<i32>} : memref<128x128xf32, #tpu.memory_space<vmem>>, vector<128x128xf32>,
    } else {
    }
    return
  }
  func.func @transform_0(%arg0: i32, %arg1: i32) -> (i32, i32) {
    %c0_i32 = arith.constant 0 : i32
    return %arg0, %arg1 : i32, i32
  }
  func.func @transform_1(%arg0: i32, %arg1: i32) -> (i32, i32) {
    %c0_i32 = arith.constant 0 : i32
    %c0_i32_0 = arith.constant 0 : i32
    return %arg1, %c0_i32 : i32, i32
  }
  func.func @transform_2(%arg0: i32, %arg1: i32) -> (i32, i32) {
    %c0_i32 = arith.constant 0 : i32
    %c0_i32_0 = arith.constant 0 : i32
    return %arg0, %c0_i32 : i32, i32
  }
  func.func @transform_3(%arg0: i32, %arg1: i32) -> (i32, i32) {
    %c0_i32 = arith.constant 0 : i32
    %c0_i32_0 = arith.constant 0 : i32
    return %arg0, %c0_i32 : i32, i32
  }
}

</mosaic_0001>

<llo_original>
// kernel: tpu_custom_call.1
$region0: #{tpu_custom_call.1}
  #allocation0 [shape = 'u32[]', space=smem, size = 0x4, offset = 0x4, fixed_abs, tag = 'smem constant byte address 0x4 - core index']
  #allocation1 [shape = 'u32[144,128]{1,0:T(1,128)}', space=vmem, size = 0x12000, scoped, tag = 'internal scratch']
  #allocation2 [shape = 'f32[128,256]{1,0:T(8,128)}', space=vmem, size = 0x20000, scoped, tag = 'scratch operand']
  %s0 = inlined_call_operand.hbm [shape: f32[128,128], index: 0, kind: input, shape index: {}]
  %s1 = inlined_call_operand.hbm [shape: f32[128,256], index: 1, kind: input, shape index: {}]
  %s2 = inlined_call_operand.hbm [shape: f32[128,128], index: 2, kind: output, shape index: {0}]
  %s3 = inlined_call_operand.hbm [shape: f32[128,128], index: 3, kind: output, shape index: {1}]
  %4 = xla_tuple %s2, %s3
  %s5 = sld [smem:[#allocation0]]
  $region42: #{tpu_custom_call.1} parent=0
    _
  %s7 = ssub.s32 1, %s5
  %s8 = scalar_select 0, %s7, %s5
  $region1: #{tpu_custom_call.1} parent=0
    #allocation3 [shape = 'u8[65536]{0}', space=vmem, size = 0x10000, scoped, tag = 'input window, operand 0, single buffered']
    #allocation4 [shape = 's32[1]{0}', space=sflag, size = 0x4, scoped, tag = 'scoped memory for tpu_custom_call.1']
    #allocation5 [shape = 's32[1]{0}', space=sflag, size = 0x4, scoped, tag = 'scoped memory for tpu_custom_call.1']
    #allocation6 [shape = 'u8[131072]{0}', space=vmem, size = 0x20000, scoped, tag = 'input window, operand 1, single buffered']
    #allocation7 [shape = 's32[1]{0}', space=sflag, size = 0x4, scoped, tag = 'scoped memory for tpu_custom_call.1']
    #allocation8 [shape = 'u8[65536]{0}', space=vmem, size = 0x10000, scoped, tag = 'output window, operand 0, single buffered']
    #allocation9 [shape = 'u8[65536]{0}', space=vmem, size = 0x10000, scoped, tag = 'output window, operand 1, single buffered']
    #allocation10 [shape = 's32[1]{0}', space=sflag, size = 0x4, scoped, tag = 'scoped memory for tpu_custom_call.1']
    %9 = vsyncpa [#allocation4], 0
    %10 = vsyncpa [#allocation7], 0
    %11 = vsyncpa [#allocation5], 0
    %12 = vsyncpa [#allocation10], 0
    // Predicated region
    $region2: #{tpu_custom_call.1} parent=1 // pred_check
      _
    $region3: #{tpu_custom_call.1} parent=1 // pred_check_branch
      %14 = sbr.rel (0) target = $region5
    $region4: #{tpu_custom_call.1} parent=1 // pred_region
      %s16 = ssub.s32 2048, 2048
      %17 = vsyncadd [#allocation4], %s16
      %s18 = sshll.u32 [#allocation3], 4
      %s19 = int_to_ptr.vmem [resolvable:$true] %s18
      %24 = dma.hbm_to_vmem [thread:$0]  %s0, 2048, %s19, [#allocation4], 128, 128, 8
    $region5: #{tpu_custom_call.1} parent=1 // pred_fallthru
      _
    // Predicated region
    $region6: #{tpu_custom_call.1} parent=1 // pred_check
      _
    $region7: #{tpu_custom_call.1} parent=1 // pred_check_branch
      %26 = sbr.rel (0) target = $region9
    $region8: #{tpu_custom_call.1} parent=1 // pred_region
      %s28 = ssub.s32 4096, 4096
      %29 = vsyncadd [#allocation7], %s28
      %s30 = sshll.u32 [#allocation6], 4
      %s31 = int_to_ptr.vmem [resolvable:$true] %s30
      %36 = dma.hbm_to_vmem [thread:$0]  %s1, 4096, %s31, [#allocation7], 256, 256, 16
    $region9: #{tpu_custom_call.1} parent=1 // pred_fallthru
      _
    // Predicated region
    $region10: #{tpu_custom_call.1} parent=1 // pred_check
      _
    $region11: #{tpu_custom_call.1} parent=1 // pred_check_branch
      %38 = sbr.rel (0) target = $region13
    $region12: #{tpu_custom_call.1} parent=1 // pred_region
      %39 = dma.done [#allocation4], 2048
    $region13: #{tpu_custom_call.1} parent=1 // pred_fallthru
      _
    // Predicated region
    $region14: #{tpu_custom_call.1} parent=1 // pred_check
      _
    $region15: #{tpu_custom_call.1} parent=1 // pred_check_branch
      %41 = sbr.rel (0) target = $region17
    $region16: #{tpu_custom_call.1} parent=1 // pred_region
      %42 = dma.done [#allocation7], 4096
    $region17: #{tpu_custom_call.1} parent=1 // pred_fallthru
      _
    %p43 = scmp.eq.s32.totalorder 0, 0
    // Predicated region
    $region18: #{tpu_custom_call.1} parent=1 // pred_check
      %p44 = pneg %p43
    $region19: #{tpu_custom_call.1} parent=1 // pred_check_branch
      %46 = sbr.rel (%p44) target = $region21
    $region20: #{tpu_custom_call.1} parent=1 // pred_region
      %47 = vst [vmem:[#allocation2] sm:$0xff] 0.0
      %48 = vst [vmem:[#allocation2 + $0x8] sm:$0xff] 0.0
      %49 = vst [vmem:[#allocation2 + $0x10] sm:$0xff] 0.0
      %50 = vst [vmem:[#allocation2 + $0x18] sm:$0xff] 0.0
      %51 = vst [vmem:[#allocation2 + $0x20] sm:$0xff] 0.0
      %52 = vst [vmem:[#allocation2 + $0x28] sm:$0xff] 0.0
      %53 = vst [vmem:[#allocation2 + $0x30] sm:$0xff] 0.0
      %54 = vst [vmem:[#allocation2 + $0x38] sm:$0xff] 0.0
      %55 = vst [vmem:[#allocation2 + $0x40] sm:$0xff] 0.0
      %56 = vst [vmem:[#allocation2 + $0x48] sm:$0xff] 0.0
      %57 = vst [vmem:[#allocation2 + $0x50] sm:$0xff] 0.0
      %58 = vst [vmem:[#allocation2 + $0x58] sm:$0xff] 0.0
      %59 = vst [vmem:[#allocation2 + $0x60] sm:$0xff] 0.0
      %60 = vst [vmem:[#allocation2 + $0x68] sm:$0xff] 0.0
      %61 = vst [vmem:[#allocation2 + $0x70] sm:$0xff] 0.0
      %62 = vst [vmem:[#allocation2 + $0x78] sm:$0xff] 0.0
      %63 = vst [vmem:[#allocation2 + $0x80] sm:$0xff] 0.0
      %64 = vst [vmem:[#allocation2 + $0x88] sm:$0xff] 0.0
      %65 = vst [vmem:[#allocation2 + $0x90] sm:$0xff] 0.0
      %66 = vst [vmem:[#allocation2 + $0x98] sm:$0xff] 0.0
      %67 = vst [vmem:[#allocation2 + $0xa0] sm:$0xff] 0.0
      %68 = vst [vmem:[#allocation2 + $0xa8] sm:$0xff] 0.0
      %69 = vst [vmem:[#allocation2 + $0xb0] sm:$0xff] 0.0
      %70 = vst [vmem:[#allocation2 + $0xb8] sm:$0xff] 0.0
      %71 = vst [vmem:[#allocation2 + $0xc0] sm:$0xff] 0.0
      %72 = vst [vmem:[#allocation2 + $0xc8] sm:$0xff] 0.0
      %73 = vst [vmem:[#allocation2 + $0xd0] sm:$0xff] 0.0
      %74 = vst [vmem:[#allocation2 + $0xd8] sm:$0xff] 0.0
      %75 = vst [vmem:[#allocation2 + $0xe0] sm:$0xff] 0.0
      %76 = vst [vmem:[#allocation2 + $0xe8] sm:$0xff] 0.0
      %77 = vst [vmem:[#allocation2 + $0xf0] sm:$0xff] 0.0
      %78 = vst [vmem:[#allocation2 + $0xf8] sm:$0xff] 0.0
    $region21: #{tpu_custom_call.1} parent=1 // pred_fallthru
      _
    %v79 = vld [vmem:[#allocation2] sm:$0xff]
    %v80 = vld [vmem:[#allocation2 + $0x8] sm:$0xff]
    %v81 = vld [vmem:[#allocation2 + $0x10] sm:$0xff]
    %v82 = vld [vmem:[#allocation2 + $0x18] sm:$0xff]
    %v83 = vld [vmem:[#allocation2 + $0x20] sm:$0xff]
    %v84 = vld [vmem:[#allocation2 + $0x28] sm:$0xff]
    %v85 = vld [vmem:[#allocation2 + $0x30] sm:$0xff]
    %v86 = vld [vmem:[#allocation2 + $0x38] sm:$0xff]
    %v87 = vld [vmem:[#allocation2 + $0x40] sm:$0xff]
    %v88 = vld [vmem:[#allocation2 + $0x48] sm:$0xff]
    %v89 = vld [vmem:[#allocation2 + $0x50] sm:$0xff]
    %v90 = vld [vmem:[#allocation2 + $0x58] sm:$0xff]
    %v91 = vld [vmem:[#allocation2 + $0x60] sm:$0xff]
    %v92 = vld [vmem:[#allocation2 + $0x68] sm:$0xff]
    %v93 = vld [vmem:[#allocation2 + $0x70] sm:$0xff]
    %v94 = vld [vmem:[#allocation2 + $0x78] sm:$0xff]
    %v95 = vld [vmem:[#allocation2 + $0x80] sm:$0xff]
    %v96 = vld [vmem:[#allocation2 + $0x88] sm:$0xff]
    %v97 = vld [vmem:[#allocation2 + $0x90] sm:$0xff]
    %v98 = vld [vmem:[#allocation2 + $0x98] sm:$0xff]
    %v99 = vld [vmem:[#allocation2 + $0xa0] sm:$0xff]
    %v100 = vld [vmem:[#allocation2 + $0xa8] sm:$0xff]
    %v101 = vld [vmem:[#allocation2 + $0xb0] sm:$0xff]
    %v102 = vld [vmem:[#allocation2 + $0xb8] sm:$0xff]
    %v103 = vld [vmem:[#allocation2 + $0xc0] sm:$0xff]
    %v104 = vld [vmem:[#allocation2 + $0xc8] sm:$0xff]
    %v105 = vld [vmem:[#allocation2 + $0xd0] sm:$0xff]
    %v106 = vld [vmem:[#allocation2 + $0xd8] sm:$0xff]
    %v107 = vld [vmem:[#allocation2 + $0xe0] sm:$0xff]
    %v108 = vld [vmem:[#allocation2 + $0xe8] sm:$0xff]
    %v109 = vld [vmem:[#allocation2 + $0xf0] sm:$0xff]
    %v110 = vld [vmem:[#allocation2 + $0xf8] sm:$0xff]
    %v111 = vld [vmem:[#allocation3] sm:$0xff]
    %v112 = vld [vmem:[#allocation3 + $0x8] sm:$0xff]
    %v113 = vld [vmem:[#allocation3 + $0x10] sm:$0xff]
    %v114 = vld [vmem:[#allocation3 + $0x18] sm:$0xff]
    %v115 = vld [vmem:[#allocation3 + $0x20] sm:$0xff]
    %v116 = vld [vmem:[#allocation3 + $0x28] sm:$0xff]
    %v117 = vld [vmem:[#allocation3 + $0x30] sm:$0xff]
    %v118 = vld [vmem:[#allocation3 + $0x38] sm:$0xff]
    %v119 = vld [vmem:[#allocation3 + $0x40] sm:$0xff]
    %v120 = vld [vmem:[#allocation3 + $0x48] sm:$0xff]
    %v121 = vld [vmem:[#allocation3 + $0x50] sm:$0xff]
    %v122 = vld [vmem:[#allocation3 + $0x58] sm:$0xff]
    %v123 = vld [vmem:[#allocation3 + $0x60] sm:$0xff]
    %v124 = vld [vmem:[#allocation3 + $0x68] sm:$0xff]
    %v125 = vld [vmem:[#allocation3 + $0x70] sm:$0xff]
    %v126 = vld [vmem:[#allocation3 + $0x78] sm:$0xff]
    %v127 = vld [vmem:[#allocation6] sm:$0xff]
    %v128 = vld [vmem:[#allocation6 + $0x8] sm:$0xff]
    %v129 = vld [vmem:[#allocation6 + $0x10] sm:$0xff]
    %v130 = vld [vmem:[#allocation6 + $0x18] sm:$0xff]
    %v131 = vld [vmem:[#allocation6 + $0x20] sm:$0xff]
    %v132 = vld [vmem:[#allocation6 + $0x28] sm:$0xff]
    %v133 = vld [vmem:[#allocation6 + $0x30] sm:$0xff]
    %v134 = vld [vmem:[#allocation6 + $0x38] sm:$0xff]
    %v135 = vld [vmem:[#allocation6 + $0x40] sm:$0xff]
    %v136 = vld [vmem:[#allocation6 + $0x48] sm:$0xff]
    %v137 = vld [vmem:[#allocation6 + $0x50] sm:$0xff]
    %v138 = vld [vmem:[#allocation6 + $0x58] sm:$0xff]
    %v139 = vld [vmem:[#allocation6 + $0x60] sm:$0xff]
    %v140 = vld [vmem:[#allocation6 + $0x68] sm:$0xff]
    %v141 = vld [vmem:[#allocation6 + $0x70] sm:$0xff]
    %v142 = vld [vmem:[#allocation6 + $0x78] sm:$0xff]
    %v143 = vld [vmem:[#allocation6 + $0x80] sm:$0xff]
    %v144 = vld [vmem:[#allocation6 + $0x88] sm:$0xff]
    %v145 = vld [vmem:[#allocation6 + $0x90] sm:$0xff]
    %v146 = vld [vmem:[#allocation6 + $0x98] sm:$0xff]
    %v147 = vld [vmem:[#allocation6 + $0xa0] sm:$0xff]
    %v148 = vld [vmem:[#allocation6 + $0xa8] sm:$0xff]
    %v149 = vld [vmem:[#allocation6 + $0xb0] sm:$0xff]
    %v150 = vld [vmem:[#allocation6 + $0xb8] sm:$0xff]
    %v151 = vld [vmem:[#allocation6 + $0xc0] sm:$0xff]
    %v152 = vld [vmem:[#allocation6 + $0xc8] sm:$0xff]
    %v153 = vld [vmem:[#allocation6 + $0xd0] sm:$0xff]
    %v154 = vld [vmem:[#allocation6 + $0xd8] sm:$0xff]
    %v155 = vld [vmem:[#allocation6 + $0xe0] sm:$0xff]
    %v156 = vld [vmem:[#allocation6 + $0xe8] sm:$0xff]
    %v157 = vld [vmem:[#allocation6 + $0xf0] sm:$0xff]
    %v158 = vld [vmem:[#allocation6 + $0xf8] sm:$0xff]
    %159 = vmatprep.subr.mxu0 %v158
    %160 = vmatpush1.msra.mxu0 %v157
    %161 = vmatprep.subr.mxu0 %v156
    %162 = vmatpush1.msra.mxu0 %v155
    %163 = vmatprep.subr.mxu0 %v154
    %164 = vmatpush1.msra.mxu0 %v153
    %165 = vmatprep.subr.mxu0 %v152
    %166 = vmatpush1.msra.mxu0 %v151
    %167 = vmatprep.subr.mxu0 %v150
    %168 = vmatpush1.msra.mxu0 %v149
    %169 = vmatprep.subr.mxu0 %v148
    %170 = vmatpush1.msra.mxu0 %v147
    %171 = vmatprep.subr.mxu0 %v146
    %172 = vmatpush1.msra.mxu0 %v145
    %173 = vmatprep.subr.mxu0 %v144
    %174 = vmatpush1.msra.mxu0 %v143
    %175 = vmatprep.subr.mxu0 %v142
    %176 = vmatpush1.msra.mxu0 %v141
    %177 = vmatprep.subr.mxu0 %v140
    %178 = vmatpush1.msra.mxu0 %v139
    %179 = vmatprep.subr.mxu0 %v138
    %180 = vmatpush1.msra.mxu0 %v137
    %181 = vmatprep.subr.mxu0 %v136
    %182 = vmatpush1.msra.mxu0 %v135
    %183 = vmatprep.subr.mxu0 %v134
    %184 = vmatpush1.msra.mxu0 %v133
    %185 = vmatprep.subr.mxu0 %v132
    %186 = vmatpush1.msra.mxu0 %v131
    %187 = vmatprep.subr.mxu0 %v130
    %188 = vmatpush1.msra.mxu0 %v129
    %189 = vmatprep.subr.mxu0 %v128
    %190 = vmatpush1.msra.mxu0 %v127
    %191 = vmatprep.subr.mxu0 0.0
    %192 = vmatpush2.msra.mxu0 0.0
    %193 = vmatprep.subr.mxu0 0.0
    %194 = vmatpush2.msra.mxu0 0.0
    %195 = vmatprep.subr.mxu0 0.0
    %196 = vmatpush2.msra.mxu0 0.0
    %197 = vmatprep.subr.mxu0 0.0
    %198 = vmatpush2.msra.mxu0 0.0
    %199 = vmatprep.subr.mxu0 0.0
    %200 = vmatpush2.msra.mxu0 0.0
    %201 = vmatprep.subr.mxu0 0.0
    %202 = vmatpush2.msra.mxu0 0.0
    %203 = vmatprep.subr.mxu0 0.0
    %204 = vmatpush2.msra.mxu0 0.0
    %205 = vmatprep.subr.mxu0 0.0
    %206 = vmatpush2.msra.mxu0 0.0
    %207 = vmatprep.subr.mxu0 0.0
    %208 = vmatpush2.msra.mxu0 0.0
    %209 = vmatprep.subr.mxu0 0.0
    %210 = vmatpush2.msra.mxu0 0.0
    %211 = vmatprep.subr.mxu0 0.0
    %212 = vmatpush2.msra.mxu0 0.0
    %213 = vmatprep.subr.mxu0 0.0
    %214 = vmatpush2.msra.mxu0 0.0
    %215 = vmatprep.subr.mxu0 0.0
    %216 = vmatpush2.msra.mxu0 0.0
    %217 = vmatprep.subr.mxu0 0.0
    %218 = vmatpush2.msra.mxu0 0.0
    %219 = vmatprep.subr.mxu0 0.0
    %220 = vmatpush2.msra.mxu0 0.0
    %221 = vmatprep.subr.mxu0 0.0
    %222 = vmatpush2.msra.mxu0 0.0
    %223 = vmatprep.mubr.f32.mxu0 0.0
    %224 = vmatmul.mubr.f32.gmra.mxu0 %v111
    %v225 = vpop.f32.mrf.mxu0
    %v226 = vadd.f32 0.0, %v225
    %v227 = vpop.f32.mrf.mxu0
    %v228 = vadd.f32 0.0, %v227
    %229 = vmatprep.mubr.f32.mxu0 0.0
    %230 = vmatmul.mubr.f32.gmra.mxu0 %v112
    %v231 = vpop.f32.mrf.mxu0
    %v232 = vadd.f32 0.0, %v231
    %v233 = vpop.f32.mrf.mxu0
    %v234 = vadd.f32 0.0, %v233
    %235 = vmatprep.mubr.f32.mxu0 0.0
    %236 = vmatmul.mubr.f32.gmra.mxu0 %v113
    %v237 = vpop.f32.mrf.mxu0
    %v238 = vadd.f32 0.0, %v237
    %v239 = vpop.f32.mrf.mxu0
    %v240 = vadd.f32 0.0, %v239
    %241 = vmatprep.mubr.f32.mxu0 0.0
    %242 = vmatmul.mubr.f32.gmra.mxu0 %v114
    %v243 = vpop.f32.mrf.mxu0
    %v244 = vadd.f32 0.0, %v243
    %v245 = vpop.f32.mrf.mxu0
    %v246 = vadd.f32 0.0, %v245
    %247 = vmatprep.mubr.f32.mxu0 0.0
    %248 = vmatmul.mubr.f32.gmra.mxu0 %v115
    %v249 = vpop.f32.mrf.mxu0
    %v250 = vadd.f32 0.0, %v249
    %v251 = vpop.f32.mrf.mxu0
    %v252 = vadd.f32 0.0, %v251
    %253 = vmatprep.mubr.f32.mxu0 0.0
    %254 = vmatmul.mubr.f32.gmra.mxu0 %v116
    %v255 = vpop.f32.mrf.mxu0
    %v256 = vadd.f32 0.0, %v255
    %v257 = vpop.f32.mrf.mxu0
    %v258 = vadd.f32 0.0, %v257
    %259 = vmatprep.mubr.f32.mxu0 0.0
    %260 = vmatmul.mubr.f32.gmra.mxu0 %v117
    %v261 = vpop.f32.mrf.mxu0
    %v262 = vadd.f32 0.0, %v261
    %v263 = vpop.f32.mrf.mxu0
    %v264 = vadd.f32 0.0, %v263
    %265 = vmatprep.mubr.f32.mxu0 0.0
    %266 = vmatmul.mubr.f32.gmra.mxu0 %v118
    %v267 = vpop.f32.mrf.mxu0
    %v268 = vadd.f32 0.0, %v267
    %v269 = vpop.f32.mrf.mxu0
    %v270 = vadd.f32 0.0, %v269
    %271 = vmatprep.mubr.f32.mxu0 0.0
    %272 = vmatmul.mubr.f32.gmra.mxu0 %v119
    %v273 = vpop.f32.mrf.mxu0
    %v274 = vadd.f32 0.0, %v273
    %v275 = vpop.f32.mrf.mxu0
    %v276 = vadd.f32 0.0, %v275
    %277 = vmatprep.mubr.f32.mxu0 0.0
    %278 = vmatmul.mubr.f32.gmra.mxu0 %v120
    %v279 = vpop.f32.mrf.mxu0
    %v280 = vadd.f32 0.0, %v279
    %v281 = vpop.f32.mrf.mxu0
    %v282 = vadd.f32 0.0, %v281
    %283 = vmatprep.mubr.f32.mxu0 0.0
    %284 = vmatmul.mubr.f32.gmra.mxu0 %v121
    %v285 = vpop.f32.mrf.mxu0
    %v286 = vadd.f32 0.0, %v285
    %v287 = vpop.f32.mrf.mxu0
    %v288 = vadd.f32 0.0, %v287
    %289 = vmatprep.mubr.f32.mxu0 0.0
    %290 = vmatmul.mubr.f32.gmra.mxu0 %v122
    %v291 = vpop.f32.mrf.mxu0
    %v292 = vadd.f32 0.0, %v291
    %v293 = vpop.f32.mrf.mxu0
    %v294 = vadd.f32 0.0, %v293
    %295 = vmatprep.mubr.f32.mxu0 0.0
    %296 = vmatmul.mubr.f32.gmra.mxu0 %v123
    %v297 = vpop.f32.mrf.mxu0
    %v298 = vadd.f32 0.0, %v297
    %v299 = vpop.f32.mrf.mxu0
    %v300 = vadd.f32 0.0, %v299
    %301 = vmatprep.mubr.f32.mxu0 0.0
    %302 = vmatmul.mubr.f32.gmra.mxu0 %v124
    %v303 = vpop.f32.mrf.mxu0
    %v304 = vadd.f32 0.0, %v303
    %v305 = vpop.f32.mrf.mxu0
    %v306 = vadd.f32 0.0, %v305
    %307 = vmatprep.mubr.f32.mxu0 0.0
    %308 = vmatmul.mubr.f32.gmra.mxu0 %v125
    %v309 = vpop.f32.mrf.mxu0
    %v310 = vadd.f32 0.0, %v309
    %v311 = vpop.f32.mrf.mxu0
    %v312 = vadd.f32 0.0, %v311
    %313 = vmatprep.mubr.f32.mxu0 0.0
    %314 = vmatmul.mubr.f32.gmra.mxu0 %v126
    %v315 = vpop.f32.mrf.mxu0
    %v316 = vadd.f32 0.0, %v315
    %v317 = vpop.f32.mrf.mxu0
    %v318 = vadd.f32 0.0, %v317
    %319 = vdwg.mxu0
    %v320 = vadd.f32 %v79, %v226
    %v321 = vadd.f32 %v80, %v228
    %v322 = vadd.f32 %v81, %v232
    %v323 = vadd.f32 %v82, %v234
    %v324 = vadd.f32 %v83, %v238
    %v325 = vadd.f32 %v84, %v240
    %v326 = vadd.f32 %v85, %v244
    %v327 = vadd.f32 %v86, %v246
    %v328 = vadd.f32 %v87, %v250
    %v329 = vadd.f32 %v88, %v252
    %v330 = vadd.f32 %v89, %v256
    %v331 = vadd.f32 %v90, %v258
    %v332 = vadd.f32 %v91, %v262
    %v333 = vadd.f32 %v92, %v264
    %v334 = vadd.f32 %v93, %v268
    %v335 = vadd.f32 %v94, %v270
    %v336 = vadd.f32 %v95, %v274
    %v337 = vadd.f32 %v96, %v276
    %v338 = vadd.f32 %v97, %v280
    %v339 = vadd.f32 %v98, %v282
    %v340 = vadd.f32 %v99, %v286
    %v341 = vadd.f32 %v100, %v288
    %v342 = vadd.f32 %v101, %v292
    %v343 = vadd.f32 %v102, %v294
    %v344 = vadd.f32 %v103, %v298
    %v345 = vadd.f32 %v104, %v300
    %v346 = vadd.f32 %v105, %v304
    %v347 = vadd.f32 %v106, %v306
    %v348 = vadd.f32 %v107, %v310
    %v349 = vadd.f32 %v108, %v312
    %v350 = vadd.f32 %v109, %v316
    %v351 = vadd.f32 %v110, %v318
    %352 = vst [vmem:[#allocation2] sm:$0xff] %v320
    %353 = vst [vmem:[#allocation2 + $0x8] sm:$0xff] %v321
    %354 = vst [vmem:[#allocation2 + $0x10] sm:$0xff] %v322
    %355 = vst [vmem:[#allocation2 + $0x18] sm:$0xff] %v323
    %356 = vst [vmem:[#allocation2 + $0x20] sm:$0xff] %v324
    %357 = vst [vmem:[#allocation2 + $0x28] sm:$0xff] %v325
    %358 = vst [vmem:[#allocation2 + $0x30] sm:$0xff] %v326
    %359 = vst [vmem:[#allocation2 + $0x38] sm:$0xff] %v327
    %360 = vst [vmem:[#allocation2 + $0x40] sm:$0xff] %v328
    %361 = vst [vmem:[#allocation2 + $0x48] sm:$0xff] %v329
    %362 = vst [vmem:[#allocation2 + $0x50] sm:$0xff] %v330
    %363 = vst [vmem:[#allocation2 + $0x58] sm:$0xff] %v331
    %364 = vst [vmem:[#allocation2 + $0x60] sm:$0xff] %v332
    %365 = vst [vmem:[#allocation2 + $0x68] sm:$0xff] %v333
    %366 = vst [vmem:[#allocation2 + $0x70] sm:$0xff] %v334
    %367 = vst [vmem:[#allocation2 + $0x78] sm:$0xff] %v335
    %368 = vst [vmem:[#allocation2 + $0x80] sm:$0xff] %v336
    %369 = vst [vmem:[#allocation2 + $0x88] sm:$0xff] %v337
    %370 = vst [vmem:[#allocation2 + $0x90] sm:$0xff] %v338
    %371 = vst [vmem:[#allocation2 + $0x98] sm:$0xff] %v339
    %372 = vst [vmem:[#allocation2 + $0xa0] sm:$0xff] %v340
    %373 = vst [vmem:[#allocation2 + $0xa8] sm:$0xff] %v341
    %374 = vst [vmem:[#allocation2 + $0xb0] sm:$0xff] %v342
    %375 = vst [vmem:[#allocation2 + $0xb8] sm:$0xff] %v343
    %376 = vst [vmem:[#allocation2 + $0xc0] sm:$0xff] %v344
    %377 = vst [vmem:[#allocation2 + $0xc8] sm:$0xff] %v345
    %378 = vst [vmem:[#allocation2 + $0xd0] sm:$0xff] %v346
    %379 = vst [vmem:[#allocation2 + $0xd8] sm:$0xff] %v347
    %380 = vst [vmem:[#allocation2 + $0xe0] sm:$0xff] %v348
    %381 = vst [vmem:[#allocation2 + $0xe8] sm:$0xff] %v349
    %382 = vst [vmem:[#allocation2 + $0xf0] sm:$0xff] %v350
    %383 = vst [vmem:[#allocation2 + $0xf8] sm:$0xff] %v351
    // Predicated region
    $region22: #{tpu_custom_call.1} parent=1 // pred_check
      %p384 = pneg %p43
    $region23: #{tpu_custom_call.1} parent=1 // pred_check_branch
      %386 = sbr.rel (%p384) target = $region25
    $region24: #{tpu_custom_call.1} parent=1 // pred_region
      %v387 = vld [vmem:[#allocation2] sm:$0xff]
      %v388 = vld [vmem:[#allocation2 + $0x8] sm:$0xff]
      %v389 = vld [vmem:[#allocation2 + $0x10] sm:$0xff]
      %v390 = vld [vmem:[#allocation2 + $0x18] sm:$0xff]
      %v391 = vld [vmem:[#allocation2 + $0x20] sm:$0xff]
      %v392 = vld [vmem:[#allocation2 + $0x28] sm:$0xff]
      %v393 = vld [vmem:[#allocation2 + $0x30] sm:$0xff]
      %v394 = vld [vmem:[#allocation2 + $0x38] sm:$0xff]
      %v395 = vld [vmem:[#allocation2 + $0x40] sm:$0xff]
      %v396 = vld [vmem:[#allocation2 + $0x48] sm:$0xff]
      %v397 = vld [vmem:[#allocation2 + $0x50] sm:$0xff]
      %v398 = vld [vmem:[#allocation2 + $0x58] sm:$0xff]
      %v399 = vld [vmem:[#allocation2 + $0x60] sm:$0xff]
      %v400 = vld [vmem:[#allocation2 + $0x68] sm:$0xff]
      %v401 = vld [vmem:[#allocation2 + $0x70] sm:$0xff]
      %v402 = vld [vmem:[#allocation2 + $0x78] sm:$0xff]
      %v403 = vld [vmem:[#allocation2 + $0x80] sm:$0xff]
      %v404 = vld [vmem:[#allocation2 + $0x88] sm:$0xff]
      %v405 = vld [vmem:[#allocation2 + $0x90] sm:$0xff]
      %v406 = vld [vmem:[#allocation2 + $0x98] sm:$0xff]
      %v407 = vld [vmem:[#allocation2 + $0xa0] sm:$0xff]
      %v408 = vld [vmem:[#allocation2 + $0xa8] sm:$0xff]
      %v409 = vld [vmem:[#allocation2 + $0xb0] sm:$0xff]
      %v410 = vld [vmem:[#allocation2 + $0xb8] sm:$0xff]
      %v411 = vld [vmem:[#allocation2 + $0xc0] sm:$0xff]
      %v412 = vld [vmem:[#allocation2 + $0xc8] sm:$0xff]
      %v413 = vld [vmem:[#allocation2 + $0xd0] sm:$0xff]
      %v414 = vld [vmem:[#allocation2 + $0xd8] sm:$0xff]
      %v415 = vld [vmem:[#allocation2 + $0xe0] sm:$0xff]
      %v416 = vld [vmem:[#allocation2 + $0xe8] sm:$0xff]
      %v417 = vld [vmem:[#allocation2 + $0xf0] sm:$0xff]
      %v418 = vld [vmem:[#allocation2 + $0xf8] sm:$0xff]
      %vm419 = vcmp.gt.f32.partialorder %v387, 0.0
      %vm420 = vcmp.gt.f32.partialorder %v389, 0.0
      %vm421 = vcmp.gt.f32.partialorder %v391, 0.0
      %vm422 = vcmp.gt.f32.partialorder %v393, 0.0
      %vm423 = vcmp.gt.f32.partialorder %v395, 0.0
      %vm424 = vcmp.gt.f32.partialorder %v397, 0.0
      %vm425 = vcmp.gt.f32.partialorder %v399, 0.0
      %vm426 = vcmp.gt.f32.partialorder %v401, 0.0
      %vm427 = vcmp.gt.f32.partialorder %v403, 0.0
      %vm428 = vcmp.gt.f32.partialorder %v405, 0.0
      %vm429 = vcmp.gt.f32.partialorder %v407, 0.0
      %vm430 = vcmp.gt.f32.partialorder %v409, 0.0
      %vm431 = vcmp.gt.f32.partialorder %v411, 0.0
      %vm432 = vcmp.gt.f32.partialorder %v413, 0.0
      %vm433 = vcmp.gt.f32.partialorder %v415, 0.0
      %vm434 = vcmp.gt.f32.partialorder %v417, 0.0
      %v435 = vmin.f32 %v387, 0.0
      %v436 = vmin.f32 %v389, 0.0
      %v437 = vmin.f32 %v391, 0.0
      %v438 = vmin.f32 %v393, 0.0
      %v439 = vmin.f32 %v395, 0.0
      %v440 = vmin.f32 %v397, 0.0
      %v441 = vmin.f32 %v399, 0.0
      %v442 = vmin.f32 %v401, 0.0
      %v443 = vmin.f32 %v403, 0.0
      %v444 = vmin.f32 %v405, 0.0
      %v445 = vmin.f32 %v407, 0.0
      %v446 = vmin.f32 %v409, 0.0
      %v447 = vmin.f32 %v411, 0.0
      %v448 = vmin.f32 %v413, 0.0
      %v449 = vmin.f32 %v415, 0.0
      %v450 = vmin.f32 %v417, 0.0
      %v451 = vmul.f32 %v435, 1.442695
      %v452 = vpow.pop %v451
      %v453 = vmul.f32 %v436, 1.442695
      %v454 = vpow.pop %v453
      %v455 = vmul.f32 %v437, 1.442695
      %v456 = vpow.pop %v455
      %v457 = vmul.f32 %v438, 1.442695
      %v458 = vpow.pop %v457
      %v459 = vmul.f32 %v439, 1.442695
      %v460 = vpow.pop %v459
      %v461 = vmul.f32 %v440, 1.442695
      %v462 = vpow.pop %v461
      %v463 = vmul.f32 %v441, 1.442695
      %v464 = vpow.pop %v463
      %v465 = vmul.f32 %v442, 1.442695
      %v466 = vpow.pop %v465
      %v467 = vmul.f32 %v443, 1.442695
      %v468 = vpow.pop %v467
      %v469 = vmul.f32 %v444, 1.442695
      %v470 = vpow.pop %v469
      %v471 = vmul.f32 %v445, 1.442695
      %v472 = vpow.pop %v471
      %v473 = vmul.f32 %v446, 1.442695
      %v474 = vpow.pop %v473
      %v475 = vmul.f32 %v447, 1.442695
      %v476 = vpow.pop %v475
      %v477 = vmul.f32 %v448, 1.442695
      %v478 = vpow.pop %v477
      %v479 = vmul.f32 %v449, 1.442695
      %v480 = vpow.pop %v479
      %v481 = vmul.f32 %v450, 1.442695
      %v482 = vpow.pop %v481
      %v483 = vsub.f32 %v452, 1.0
      %v484 = vsub.f32 %v454, 1.0
      %v485 = vsub.f32 %v456, 1.0
      %v486 = vsub.f32 %v458, 1.0
      %v487 = vsub.f32 %v460, 1.0
      %v488 = vsub.f32 %v462, 1.0
      %v489 = vsub.f32 %v464, 1.0
      %v490 = vsub.f32 %v466, 1.0
      %v491 = vsub.f32 %v468, 1.0
      %v492 = vsub.f32 %v470, 1.0
      %v493 = vsub.f32 %v472, 1.0
      %v494 = vsub.f32 %v474, 1.0
      %v495 = vsub.f32 %v476, 1.0
      %v496 = vsub.f32 %v478, 1.0
      %v497 = vsub.f32 %v480, 1.0
      %v498 = vsub.f32 %v482, 1.0
      %v499 = vsel %vm419, %v387, %v483
      %v500 = vsel %vm420, %v389, %v484
      %v501 = vsel %vm421, %v391, %v485
      %v502 = vsel %vm422, %v393, %v486
      %v503 = vsel %vm423, %v395, %v487
      %v504 = vsel %vm424, %v397, %v488
      %v505 = vsel %vm425, %v399, %v489
      %v506 = vsel %vm426, %v401, %v490
      %v507 = vsel %vm427, %v403, %v491
      %v508 = vsel %vm428, %v405, %v492
      %v509 = vsel %vm429, %v407, %v493
      %v510 = vsel %vm430, %v409, %v494
      %v511 = vsel %vm431, %v411, %v495
      %v512 = vsel %vm432, %v413, %v496
      %v513 = vsel %vm433, %v415, %v497
      %v514 = vsel %vm434, %v417, %v498
      %v515 = vmax.f32 %v388, 0.0
      %v516 = vmax.f32 %v390, 0.0
      %v517 = vmax.f32 %v392, 0.0
      %v518 = vmax.f32 %v394, 0.0
      %v519 = vmax.f32 %v396, 0.0
      %v520 = vmax.f32 %v398, 0.0
      %v521 = vmax.f32 %v400, 0.0
      %v522 = vmax.f32 %v402, 0.0
      %v523 = vmax.f32 %v404, 0.0
      %v524 = vmax.f32 %v406, 0.0
      %v525 = vmax.f32 %v408, 0.0
      %v526 = vmax.f32 %v410, 0.0
      %v527 = vmax.f32 %v412, 0.0
      %v528 = vmax.f32 %v414, 0.0
      %v529 = vmax.f32 %v416, 0.0
      %v530 = vmax.f32 %v418, 0.0
      %v531 = vmul.f32 %v515, -1.0
      %v532 = vmul.f32 %v516, -1.0
      %v533 = vmul.f32 %v517, -1.0
      %v534 = vmul.f32 %v518, -1.0
      %v535 = vmul.f32 %v519, -1.0
      %v536 = vmul.f32 %v520, -1.0
      %v537 = vmul.f32 %v521, -1.0
      %v538 = vmul.f32 %v522, -1.0
      %v539 = vmul.f32 %v523, -1.0
      %v540 = vmul.f32 %v524, -1.0
      %v541 = vmul.f32 %v525, -1.0
      %v542 = vmul.f32 %v526, -1.0
      %v543 = vmul.f32 %v527, -1.0
      %v544 = vmul.f32 %v528, -1.0
      %v545 = vmul.f32 %v529, -1.0
      %v546 = vmul.f32 %v530, -1.0
      %v547 = vmul.f32 %v531, 1.442695
      %v548 = vpow.pop %v547
      %v549 = vmul.f32 %v532, 1.442695
      %v550 = vpow.pop %v549
      %v551 = vmul.f32 %v533, 1.442695
      %v552 = vpow.pop %v551
      %v553 = vmul.f32 %v534, 1.442695
      %v554 = vpow.pop %v553
      %v555 = vmul.f32 %v535, 1.442695
      %v556 = vpow.pop %v555
      %v557 = vmul.f32 %v536, 1.442695
      %v558 = vpow.pop %v557
      %v559 = vmul.f32 %v537, 1.442695
      %v560 = vpow.pop %v559
      %v561 = vmul.f32 %v538, 1.442695
      %v562 = vpow.pop %v561
      %v563 = vmul.f32 %v539, 1.442695
      %v564 = vpow.pop %v563
      %v565 = vmul.f32 %v540, 1.442695
      %v566 = vpow.pop %v565
      %v567 = vmul.f32 %v541, 1.442695
      %v568 = vpow.pop %v567
      %v569 = vmul.f32 %v542, 1.442695
      %v570 = vpow.pop %v569
      %v571 = vmul.f32 %v543, 1.442695
      %v572 = vpow.pop %v571
      %v573 = vmul.f32 %v544, 1.442695
      %v574 = vpow.pop %v573
      %v575 = vmul.f32 %v545, 1.442695
      %v576 = vpow.pop %v575
      %v577 = vmul.f32 %v546, 1.442695
      %v578 = vpow.pop %v577
      %v579 = vmul.f32 %v499, %v548
      %v580 = vmul.f32 %v500, %v550
      %v581 = vmul.f32 %v501, %v552
      %v582 = vmul.f32 %v502, %v554
      %v583 = vmul.f32 %v503, %v556
      %v584 = vmul.f32 %v504, %v558
      %v585 = vmul.f32 %v505, %v560
      %v586 = vmul.f32 %v506, %v562
      %v587 = vmul.f32 %v507, %v564
      %v588 = vmul.f32 %v508, %v566
      %v589 = vmul.f32 %v509, %v568
      %v590 = vmul.f32 %v510, %v570
      %v591 = vmul.f32 %v511, %v572
      %v592 = vmul.f32 %v512, %v574
      %v593 = vmul.f32 %v513, %v576
      %v594 = vmul.f32 %v514, %v578
      %595 = vst [vmem:[#allocation8] sm:$0xff] %v579
      %596 = vst [vmem:[#allocation8 + $0x8] sm:$0xff] %v580
      %597 = vst [vmem:[#allocation8 + $0x10] sm:$0xff] %v581
      %598 = vst [vmem:[#allocation8 + $0x18] sm:$0xff] %v582
      %599 = vst [vmem:[#allocation8 + $0x20] sm:$0xff] %v583
      %600 = vst [vmem:[#allocation8 + $0x28] sm:$0xff] %v584
      %601 = vst [vmem:[#allocation8 + $0x30] sm:$0xff] %v585
      %602 = vst [vmem:[#allocation8 + $0x38] sm:$0xff] %v586
      %603 = vst [vmem:[#allocation8 + $0x40] sm:$0xff] %v587
      %604 = vst [vmem:[#allocation8 + $0x48] sm:$0xff] %v588
      %605 = vst [vmem:[#allocation8 + $0x50] sm:$0xff] %v589
      %606 = vst [vmem:[#allocation8 + $0x58] sm:$0xff] %v590
      %607 = vst [vmem:[#allocation8 + $0x60] sm:$0xff] %v591
      %608 = vst [vmem:[#allocation8 + $0x68] sm:$0xff] %v592
      %609 = vst [vmem:[#allocation8 + $0x70] sm:$0xff] %v593
      %610 = vst [vmem:[#allocation8 + $0x78] sm:$0xff] %v594
      %v611 = vmul.f32 %v515, %v548
      %v612 = vmul.f32 %v516, %v550
      %v613 = vmul.f32 %v517, %v552
      %v614 = vmul.f32 %v518, %v554
      %v615 = vmul.f32 %v519, %v556
      %v616 = vmul.f32 %v520, %v558
      %v617 = vmul.f32 %v521, %v560
      %v618 = vmul.f32 %v522, %v562
      %v619 = vmul.f32 %v523, %v564
      %v620 = vmul.f32 %v524, %v566
      %v621 = vmul.f32 %v525, %v568
      %v622 = vmul.f32 %v526, %v570
      %v623 = vmul.f32 %v527, %v572
      %v624 = vmul.f32 %v528, %v574
      %v625 = vmul.f32 %v529, %v576
      %v626 = vmul.f32 %v530, %v578
      %v627 = vmul.f32 %v611, %v548
      %v628 = vmul.f32 %v612, %v550
      %v629 = vmul.f32 %v613, %v552
      %v630 = vmul.f32 %v614, %v554
      %v631 = vmul.f32 %v615, %v556
      %v632 = vmul.f32 %v616, %v558
      %v633 = vmul.f32 %v617, %v560
      %v634 = vmul.f32 %v618, %v562
      %v635 = vmul.f32 %v619, %v564
      %v636 = vmul.f32 %v620, %v566
      %v637 = vmul.f32 %v621, %v568
      %v638 = vmul.f32 %v622, %v570
      %v639 = vmul.f32 %v623, %v572
      %v640 = vmul.f32 %v624, %v574
      %v641 = vmul.f32 %v625, %v576
      %v642 = vmul.f32 %v626, %v578
      %643 = vst [vmem:[#allocation9] sm:$0xff] %v627
      %644 = vst [vmem:[#allocation9 + $0x8] sm:$0xff] %v628
      %645 = vst [vmem:[#allocation9 + $0x10] sm:$0xff] %v629
      %646 = vst [vmem:[#allocation9 + $0x18] sm:$0xff] %v630
      %647 = vst [vmem:[#allocation9 + $0x20] sm:$0xff] %v631
      %648 = vst [vmem:[#allocation9 + $0x28] sm:$0xff] %v632
      %649 = vst [vmem:[#allocation9 + $0x30] sm:$0xff] %v633
      %650 = vst [vmem:[#allocation9 + $0x38] sm:$0xff] %v634
      %651 = vst [vmem:[#allocation9 + $0x40] sm:$0xff] %v635
      %652 = vst [vmem:[#allocation9 + $0x48] sm:$0xff] %v636
      %653 = vst [vmem:[#allocation9 + $0x50] sm:$0xff] %v637
      %654 = vst [vmem:[#allocation9 + $0x58] sm:$0xff] %v638
      %655 = vst [vmem:[#allocation9 + $0x60] sm:$0xff] %v639
      %656 = vst [vmem:[#allocation9 + $0x68] sm:$0xff] %v640
      %657 = vst [vmem:[#allocation9 + $0x70] sm:$0xff] %v641
      %658 = vst [vmem:[#allocation9 + $0x78] sm:$0xff] %v642
    $region25: #{tpu_custom_call.1} parent=1 // pred_fallthru
      _
    // Predicated region
    $region26: #{tpu_custom_call.1} parent=1 // pred_check
      _
    $region27: #{tpu_custom_call.1} parent=1 // pred_check_branch
      %660 = sbr.rel (0) target = $region29
    $region28: #{tpu_custom_call.1} parent=1 // pred_region
      %s662 = ssub.s32 2048, 2048
      %663 = vsyncadd [#allocation5], %s662
      %s664 = sshll.u32 [#allocation8], 4
      %s665 = int_to_ptr.vmem [resolvable:$true] %s664
      %670 = dma.vmem_to_hbm [thread:$0]  %s665, 2048, %s2, [#allocation5], 128, 128, 8
    $region29: #{tpu_custom_call.1} parent=1 // pred_fallthru
      _
    // Predicated region
    $region30: #{tpu_custom_call.1} parent=1 // pred_check
      _
    $region31: #{tpu_custom_call.1} parent=1 // pred_check_branch
      %672 = sbr.rel (0) target = $region33
    $region32: #{tpu_custom_call.1} parent=1 // pred_region
      %s674 = ssub.s32 2048, 2048
      %675 = vsyncadd [#allocation10], %s674
      %s676 = sshll.u32 [#allocation9], 4
      %s677 = int_to_ptr.vmem [resolvable:$true] %s676
      %682 = dma.vmem_to_hbm [thread:$0]  %s677, 2048, %s3, [#allocation10], 128, 128, 8
    $region33: #{tpu_custom_call.1} parent=1 // pred_fallthru
      _
    // Predicated region
    $region34: #{tpu_custom_call.1} parent=1 // pred_check
      _
    $region35: #{tpu_custom_call.1} parent=1 // pred_check_branch
      %684 = sbr.rel (0) target = $region37
    $region36: #{tpu_custom_call.1} parent=1 // pred_region
      %685 = dma.done [#allocation5], 2048
    $region37: #{tpu_custom_call.1} parent=1 // pred_fallthru
      _
    // Predicated region
    $region38: #{tpu_custom_call.1} parent=1 // pred_check
      _
    $region39: #{tpu_custom_call.1} parent=1 // pred_check_branch
      %687 = sbr.rel (0) target = $region41
    $region40: #{tpu_custom_call.1} parent=1 // pred_region
      %688 = dma.done [#allocation10], 2048
    $region41: #{tpu_custom_call.1} parent=1 // pred_fallthru
      _
    %689 = vsyncpa [#allocation4], 1
    %690 = vsyncpa [#allocation7], 1
    %691 = vsyncpa [#allocation5], 1
    %692 = vsyncpa [#allocation10], 1

</llo_original>
